<compile_context>
chip_gen: v5e
topology: v5e:2x2
jax: 0.10.0
libtpu: 0.0.40
codegen_flags: <defaults>
</compile_context>

<pallas_src>
import jax
import jax.numpy as jnp
from jax.experimental import pallas as pl
from jax.experimental.pallas import tpu as pltpu


S = 12        # per-sample lane stride inside the kernel (= conv f0 output length)
TRUNC = 11    # total lane shrink across f2..f9 = sum(K-1) = 1+2+7+0+1


# --------------------------------- kernel -----------------------------------
def net_kernel(xcol_ref, w0_ref, w2_ref, w3_ref, w5_ref, b5_ref,
               w7_ref, w9_ref, b9_ref, out_ref):
    def conv(h, w_ref, bias=None):
        """im2col conv: h (C, n) with flattened weight w (O, K*C) -> (O, n-K+1)."""
        c_in = h.shape[0]
        ksz = w_ref.shape[1] // c_in          # K is encoded in the weight slab width
        width = h.shape[1] - (ksz - 1)
        if ksz == 1:
            col = h
        else:
            # K lane-shifted copies stacked on the sublane axis (tile-aligned:
            # c_in is padded to a multiple of 8 in the wrapper).
            col = jnp.concatenate([h[:, k:k + width] for k in range(ksz)], axis=0)
        out = jnp.dot(w_ref[...], col, preferred_element_type=jnp.float32)
        if bias is not None:
            out = out + bias                  # bias loaded once per kernel step
        return out

    h = jnp.maximum(conv(xcol_ref[...], w0_ref), 0.0)      # f0 + f1  (im2col in wrapper)
    h = conv(h, w2_ref)                                     # f2
    h = jnp.maximum(conv(h, w3_ref), 0.0)                   # f3 + f4
    h = jnp.maximum(conv(h, w5_ref, b5_ref[...]), 0.0)      # f5 + f6
    h = jnp.maximum(conv(h, w7_ref), 0.0)                   # f7 + f8
    logits = conv(h, w9_ref, b9_ref[...])                   # f9       -> (10, n-11)
    logits = logits[:, : out_ref.shape[1]]

    # f10: LogSoftmax over channels (sublane axis), independently per lane column.
    m = jnp.max(logits, axis=0, keepdims=True)
    z = logits - m
    lse = jnp.log(jnp.sum(jnp.exp(z), axis=0, keepdims=True))
    out_ref[...] = z - lse                                  # one lane-dense store


# ------------------------------ host-side prep ------------------------------
def _flatten_w(w, c_in_pad, c_out_pad):
    """(O, C, K) PyTorch Conv1d weight -> (c_out_pad, K*c_in_pad), k-major/c-minor."""
    o, c, k = w.shape
    wt = jnp.transpose(w, (0, 2, 1)).astype(jnp.float32)             # (O, K, C)
    wt = jnp.pad(wt, ((0, c_out_pad - o), (0, 0), (0, c_in_pad - c)))
    return wt.reshape(c_out_pad, k * c_in_pad)


def _im2col_conv0(x):
    """x (Bp, 16, 49) -> (608, Bp*12); row = k*16 + c, column = b*12 + l."""
    bp = x.shape[0]
    patches = jnp.stack([x[:, :, k:k + S] for k in range(38)], axis=1)  # (Bp, 38, 16, 12)
    cols = patches.reshape(bp, 38 * 16, S)
    return jnp.transpose(cols, (1, 0, 2)).reshape(38 * 16, bp * S)


def conv1drelu_25_forward(x, w0, w2, w3, w5, b5, w7, w9, b9, *, batch_block=None):
    """x: (B, 16, 49) float32, weights in PyTorch Conv1d layout (O, C, K) -> (B, 10)."""
    B = x.shape[0]
    bb = B if batch_block is None else batch_block     # samples per grid step
    nblk = -(-B // bb)
    Bp = nblk * bb
    if nblk > 1:
        # block lane widths must be multiples of 128 when the batch is split
        assert (bb * S) % 128 == 0, "batch_block must be a multiple of 32 when splitting"

    xin = x.reshape(B, 16, 49).astype(jnp.float32)
    if Bp != B:
        xin = jnp.pad(xin, ((0, Bp - B), (0, 0), (0, 0)))

    w_out = bb * S                      # output lanes per block
    w_in = bb * S + TRUNC               # input lanes per block (absorbs all truncation)
    if nblk > 1:
        w_in = -(-w_in // 128) * 128

    # Layer-0 im2col, laid out per batch block with zero padding on the right.
    x_col = _im2col_conv0(xin)                               # (608, Bp*12)
    x_col = x_col.reshape(608, nblk, bb * S)
    x_col = jnp.pad(x_col, ((0, 0), (0, 0), (0, w_in - bb * S)))
    x_col = x_col.reshape(608, nblk * w_in)

    # 2-D weight slabs; channel counts padded to multiples of 8 (zeros -> no effect).
    w0f = _flatten_w(w0, 16, 24)        # (24, 608)
    w2f = _flatten_w(w2, 24, 40)        # (40, 48)
    w3f = _flatten_w(w3, 40, 56)        # (56, 120)
    w5f = _flatten_w(w5, 56, 48)        # (48, 448)
    w7f = _flatten_w(w7, 48, 64)        # (64, 48)
    w9f = _flatten_w(w9, 64, 10)        # (10, 128)   final layer NOT channel-padded
    b5p = jnp.pad(b5.astype(jnp.float32), (0, 48 - 45)).reshape(48, 1)
    b9p = b9.astype(jnp.float32).reshape(10, 1)
    weights = (w0f, w2f, w3f, w5f, b5p, w7f, w9f, b9p)

    in_specs = [pl.BlockSpec((608, w_in), lambda i: (0, i))]
    in_specs += [pl.BlockSpec(w.shape, lambda i: (0, 0)) for w in weights]
    out_specs = pl.BlockSpec((10, w_out), lambda i: (0, i))

    out = pl.pallas_call(
        net_kernel,
        out_shape=jax.ShapeDtypeStruct((10, nblk * w_out), jnp.float32),
        grid=(nblk,),
        in_specs=in_specs,
        out_specs=out_specs,
        compiler_params=pltpu.CompilerParams(
            dimension_semantics=("parallel",)),   # megacore sharding on v7x when nblk > 1
    )(x_col, *weights)

    logits = out[:, : B * S : S]        # valid column of each sample -> (10, B)
    return jnp.transpose(logits)        # (B, 10)


# ---------------- pure-JAX reference (for correctness check only) -----------
def ref_forward(x, w0, w2, w3, w5, b5, w7, w9, b9):
    def conv(h, w, b=None):
        o, c, k = w.shape
        l_out = h.shape[2] - k + 1
        out = jnp.zeros((h.shape[0], o, l_out), jnp.float32)
        for kk in range(k):
            out = out + jnp.einsum('oc,bcl->bol', w[:, :, kk], h[:, :, kk:kk + l_out])
        if b is not None:
            out = out + b[None, :, None]
        return out

    h = jax.nn.relu(conv(x, w0))
    h = conv(h, w2)
    h = jax.nn.relu(conv(h, w3))
    h = jax.nn.relu(conv(h, w5, b5))
    h = jax.nn.relu(conv(h, w7))
    h = conv(h, w9, b9)
    return jax.nn.log_softmax(h[:, :, 0], axis=1)


if __name__ == "__main__":
    key = jax.random.PRNGKey(0)
    keys = jax.random.split(key, 10)

    def conv_weight(k, o, c, ksz):
        bound = 1.0 / (c * ksz) ** 0.5
        return jax.random.uniform(k, (o, c, ksz), jnp.float32, -bound, bound)

    w0 = conv_weight(keys[0], 19, 16, 38)
    w2 = conv_weight(keys[1], 37, 19, 2)
    w3 = conv_weight(keys[2], 55, 37, 3)
    w5 = conv_weight(keys[3], 45, 55, 8)
    b5 = jax.random.uniform(keys[4], (45,), jnp.float32,
                            -1.0 / (55 * 8) ** 0.5, 1.0 / (55 * 8) ** 0.5)
    w7 = conv_weight(keys[5], 63, 45, 1)
    w9 = conv_weight(keys[6], 10, 63, 2)
    b9 = jax.random.uniform(keys[7], (10,), jnp.float32,
                            -1.0 / (63 * 2) ** 0.5, 1.0 / (63 * 2) ** 0.5)
    params = (w0, w2, w3, w5, b5, w7, w9, b9)

    # Small batch: single kernel step, whole batch lane-resident (v5e/v6e path).
    x = jax.random.normal(keys[8], (2, 16, 49), jnp.float32)
    out = jax.block_until_ready(conv1drelu_25_forward(x, *params))
    ref = ref_forward(x, *params)
    assert out.shape == (2, 10)
    assert jnp.allclose(out, ref, atol=2e-4, rtol=2e-4), \
        float(jnp.max(jnp.abs(out - ref)))

    # Larger batch: parallel grid over batch blocks (megacore path on v7x).
    x64 = jax.random.normal(keys[9], (64, 16, 49), jnp.float32)
    out64 = jax.block_until_ready(conv1drelu_25_forward(x64, *params, batch_block=32))
    ref64 = ref_forward(x64, *params)
    assert out64.shape == (64, 10)
    assert jnp.allclose(out64, ref64, atol=2e-4, rtol=2e-4), \
        float(jnp.max(jnp.abs(out64 - ref64)))

    print("KERNEL_OK")
</pallas_src>

<mosaic_0001>
module attributes {stable_mosaic.version = 11 : i64} {
  func.func @net_kernel(%arg0: i32, %arg1: memref<608x35xf32, #tpu.memory_space<vmem>>, %arg2: memref<24x608xf32, #tpu.memory_space<vmem>>, %arg3: memref<40x48xf32, #tpu.memory_space<vmem>>, %arg4: memref<56x120xf32, #tpu.memory_space<vmem>>, %arg5: memref<48x448xf32, #tpu.memory_space<vmem>>, %arg6: memref<48x1xf32, #tpu.memory_space<vmem>>, %arg7: memref<64x48xf32, #tpu.memory_space<vmem>>, %arg8: memref<10x128xf32, #tpu.memory_space<vmem>>, %arg9: memref<10x1xf32, #tpu.memory_space<vmem>>, %arg10: memref<10x24xf32, #tpu.memory_space<vmem>>) attributes {dimension_semantics = [#tpu.dimension_semantics<parallel>], iteration_bounds = array<i64: 1>, scalar_prefetch = 0 : i64, scratch_operands = 0 : i64, tpu.core_type = #tpu.core_type<tc>, window_params = [{transform_indices = @transform_0, window_bounds = array<i64: 608, 35>}, {pipeline_mode = #tpu.pipeline_mode<synchronous>, transform_indices = @transform_1, window_bounds = array<i64: 24, 608>}, {pipeline_mode = #tpu.pipeline_mode<synchronous>, transform_indices = @transform_2, window_bounds = array<i64: 40, 48>}, {pipeline_mode = #tpu.pipeline_mode<synchronous>, transform_indices = @transform_3, window_bounds = array<i64: 56, 120>}, {pipeline_mode = #tpu.pipeline_mode<synchronous>, transform_indices = @transform_4, window_bounds = array<i64: 48, 448>}, {pipeline_mode = #tpu.pipeline_mode<synchronous>, transform_indices = @transform_5, window_bounds = array<i64: 48, 1>}, {pipeline_mode = #tpu.pipeline_mode<synchronous>, transform_indices = @transform_6, window_bounds = array<i64: 64, 48>}, {pipeline_mode = #tpu.pipeline_mode<synchronous>, transform_indices = @transform_7, window_bounds = array<i64: 10, 128>}, {pipeline_mode = #tpu.pipeline_mode<synchronous>, transform_indices = @transform_8, window_bounds = array<i64: 10, 1>}, {transform_indices = @transform_9, window_bounds = array<i64: 10, 24>}]} {
    %c0 = arith.constant 0 : index
    %c0_0 = arith.constant 0 : index
    %0 = vector.load %arg1[%c0, %c0_0] : memref<608x35xf32, #tpu.memory_space<vmem>>, vector<608x35xf32>
    %c0_1 = arith.constant 0 : index
    %c0_2 = arith.constant 0 : index
    %1 = vector.load %arg2[%c0_1, %c0_2] : memref<24x608xf32, #tpu.memory_space<vmem>>, vector<24x608xf32>
    %cst = arith.constant dense<0.000000e+00> : vector<24x35xf32>
    %2 = tpu.matmul %1, %0, %cst {dimension_numbers = #tpu.dot_dimension_numbers<[1], [0], [0], [1], [0, 0, 1, 1], [], []>} : vector<24x608xf32>, vector<608x35xf32>, vector<24x35xf32> -> vector<24x35xf32>
    %cst_3 = arith.constant 0.000000e+00 : f32
    %3 = vector.broadcast %cst_3 : f32 to vector<24x35xf32>
    %4 = arith.maximumf %2, %3 : vector<24x35xf32>
    %5 = vector.extract_strided_slice %4 {offsets = [0, 0], sizes = [24, 34], strides = [1, 1]} : vector<24x35xf32> to vector<24x34xf32>
    %6 = vector.extract_strided_slice %4 {offsets = [0, 1], sizes = [24, 34], strides = [1, 1]} : vector<24x35xf32> to vector<24x34xf32>
    %7 = tpu.concatenate %5, %6 in 0 : vector<24x34xf32>, vector<24x34xf32> -> vector<48x34xf32>
    %c0_4 = arith.constant 0 : index
    %c0_5 = arith.constant 0 : index
    %8 = vector.load %arg3[%c0_4, %c0_5] : memref<40x48xf32, #tpu.memory_space<vmem>>, vector<40x48xf32>
    %cst_6 = arith.constant dense<0.000000e+00> : vector<40x34xf32>
    %9 = tpu.matmul %8, %7, %cst_6 {dimension_numbers = #tpu.dot_dimension_numbers<[1], [0], [0], [1], [0, 0, 1, 1], [], []>} : vector<40x48xf32>, vector<48x34xf32>, vector<40x34xf32> -> vector<40x34xf32>
    %10 = vector.extract_strided_slice %9 {offsets = [0, 0], sizes = [40, 32], strides = [1, 1]} : vector<40x34xf32> to vector<40x32xf32>
    %11 = vector.extract_strided_slice %9 {offsets = [0, 1], sizes = [40, 32], strides = [1, 1]} : vector<40x34xf32> to vector<40x32xf32>
    %12 = vector.extract_strided_slice %9 {offsets = [0, 2], sizes = [40, 32], strides = [1, 1]} : vector<40x34xf32> to vector<40x32xf32>
    %13 = tpu.concatenate %10, %11, %12 in 0 : vector<40x32xf32>, vector<40x32xf32>, vector<40x32xf32> -> vector<120x32xf32>
    %c0_7 = arith.constant 0 : index
    %c0_8 = arith.constant 0 : index
    %14 = vector.load %arg4[%c0_7, %c0_8] : memref<56x120xf32, #tpu.memory_space<vmem>>, vector<56x120xf32>
    %cst_9 = arith.constant dense<0.000000e+00> : vector<56x32xf32>
    %15 = tpu.matmul %14, %13, %cst_9 {dimension_numbers = #tpu.dot_dimension_numbers<[1], [0], [0], [1], [0, 0, 1, 1], [], []>} : vector<56x120xf32>, vector<120x32xf32>, vector<56x32xf32> -> vector<56x32xf32>
    %cst_10 = arith.constant 0.000000e+00 : f32
    %16 = vector.broadcast %cst_10 : f32 to vector<56x32xf32>
    %17 = arith.maximumf %15, %16 : vector<56x32xf32>
    %c0_11 = arith.constant 0 : index
    %c0_12 = arith.constant 0 : index
    %18 = vector.load %arg6[%c0_11, %c0_12] : memref<48x1xf32, #tpu.memory_space<vmem>>, vector<48x1xf32>
    %19 = vector.extract_strided_slice %17 {offsets = [0, 0], sizes = [56, 25], strides = [1, 1]} : vector<56x32xf32> to vector<56x25xf32>
    %20 = vector.extract_strided_slice %17 {offsets = [0, 1], sizes = [56, 25], strides = [1, 1]} : vector<56x32xf32> to vector<56x25xf32>
    %21 = vector.extract_strided_slice %17 {offsets = [0, 2], sizes = [56, 25], strides = [1, 1]} : vector<56x32xf32> to vector<56x25xf32>
    %22 = vector.extract_strided_slice %17 {offsets = [0, 3], sizes = [56, 25], strides = [1, 1]} : vector<56x32xf32> to vector<56x25xf32>
    %23 = vector.extract_strided_slice %17 {offsets = [0, 4], sizes = [56, 25], strides = [1, 1]} : vector<56x32xf32> to vector<56x25xf32>
    %24 = vector.extract_strided_slice %17 {offsets = [0, 5], sizes = [56, 25], strides = [1, 1]} : vector<56x32xf32> to vector<56x25xf32>
    %25 = vector.extract_strided_slice %17 {offsets = [0, 6], sizes = [56, 25], strides = [1, 1]} : vector<56x32xf32> to vector<56x25xf32>
    %26 = vector.extract_strided_slice %17 {offsets = [0, 7], sizes = [56, 25], strides = [1, 1]} : vector<56x32xf32> to vector<56x25xf32>
    %27 = tpu.concatenate %19, %20, %21, %22, %23, %24, %25, %26 in 0 : vector<56x25xf32>, vector<56x25xf32>, vector<56x25xf32>, vector<56x25xf32>, vector<56x25xf32>, vector<56x25xf32>, vector<56x25xf32>, vector<56x25xf32> -> vector<448x25xf32>
    %c0_13 = arith.constant 0 : index
    %c0_14 = arith.constant 0 : index
    %28 = vector.load %arg5[%c0_13, %c0_14] : memref<48x448xf32, #tpu.memory_space<vmem>>, vector<48x448xf32>
    %cst_15 = arith.constant dense<0.000000e+00> : vector<48x25xf32>
    %29 = tpu.matmul %28, %27, %cst_15 {dimension_numbers = #tpu.dot_dimension_numbers<[1], [0], [0], [1], [0, 0, 1, 1], [], []>} : vector<48x448xf32>, vector<448x25xf32>, vector<48x25xf32> -> vector<48x25xf32>
    %30 = vector.broadcast %18 : vector<48x1xf32> to vector<48x25xf32>
    %31 = arith.addf %29, %30 : vector<48x25xf32>
    %cst_16 = arith.constant 0.000000e+00 : f32
    %32 = vector.broadcast %cst_16 : f32 to vector<48x25xf32>
    %33 = arith.maximumf %31, %32 : vector<48x25xf32>
    %c0_17 = arith.constant 0 : index
    %c0_18 = arith.constant 0 : index
    %34 = vector.load %arg7[%c0_17, %c0_18] : memref<64x48xf32, #tpu.memory_space<vmem>>, vector<64x48xf32>
    %cst_19 = arith.constant dense<0.000000e+00> : vector<64x25xf32>
    %35 = tpu.matmul %34, %33, %cst_19 {dimension_numbers = #tpu.dot_dimension_numbers<[1], [0], [0], [1], [0, 0, 1, 1], [], []>} : vector<64x48xf32>, vector<48x25xf32>, vector<64x25xf32> -> vector<64x25xf32>
    %cst_20 = arith.constant 0.000000e+00 : f32
    %36 = vector.broadcast %cst_20 : f32 to vector<64x25xf32>
    %37 = arith.maximumf %35, %36 : vector<64x25xf32>
    %c0_21 = arith.constant 0 : index
    %c0_22 = arith.constant 0 : index
    %38 = vector.load %arg9[%c0_21, %c0_22] : memref<10x1xf32, #tpu.memory_space<vmem>>, vector<10x1xf32>
    %39 = vector.extract_strided_slice %37 {offsets = [0, 0], sizes = [64, 24], strides = [1, 1]} : vector<64x25xf32> to vector<64x24xf32>
    %40 = vector.extract_strided_slice %37 {offsets = [0, 1], sizes = [64, 24], strides = [1, 1]} : vector<64x25xf32> to vector<64x24xf32>
    %41 = tpu.concatenate %39, %40 in 0 : vector<64x24xf32>, vector<64x24xf32> -> vector<128x24xf32>
    %c0_23 = arith.constant 0 : index
    %c0_24 = arith.constant 0 : index
    %42 = vector.load %arg8[%c0_23, %c0_24] : memref<10x128xf32, #tpu.memory_space<vmem>>, vector<10x128xf32>
    %cst_25 = arith.constant dense<0.000000e+00> : vector<10x24xf32>
    %43 = tpu.matmul %42, %41, %cst_25 {dimension_numbers = #tpu.dot_dimension_numbers<[1], [0], [0], [1], [0, 0, 1, 1], [], []>} : vector<10x128xf32>, vector<128x24xf32>, vector<10x24xf32> -> vector<10x24xf32>
    %44 = vector.broadcast %38 : vector<10x1xf32> to vector<10x24xf32>
    %45 = arith.addf %43, %44 : vector<10x24xf32>
    %cst_26 = arith.constant dense<0xFF800000> : vector<24xf32>
    %46 = vector.multi_reduction <maximumf>, %45, %cst_26 [0] : vector<10x24xf32> to vector<24xf32>
    %47 = vector.shape_cast %46 : vector<24xf32> to vector<1x24xf32>
    %48 = vector.broadcast %47 : vector<1x24xf32> to vector<10x24xf32>
    %49 = arith.subf %45, %48 : vector<10x24xf32>
    %50 = math.exp %49 : vector<10x24xf32>
    %cst_27 = arith.constant dense<0.000000e+00> : vector<24xf32>
    %51 = vector.multi_reduction <add>, %50, %cst_27 [0] : vector<10x24xf32> to vector<24xf32>
    %52 = vector.shape_cast %51 : vector<24xf32> to vector<1x24xf32>
    %53 = math.log %52 : vector<1x24xf32>
    %54 = vector.broadcast %53 : vector<1x24xf32> to vector<10x24xf32>
    %55 = arith.subf %49, %54 : vector<10x24xf32>
    %c0_28 = arith.constant 0 : index
    %c0_29 = arith.constant 0 : index
    %56 = vector.load %arg10[%c0_28, %c0_29] : memref<10x24xf32, #tpu.memory_space<vmem>>, vector<10x24xf32>
    tpu.vector_store %arg10[%c0_28, %c0_29], %55 {strides = array<i32>} : memref<10x24xf32, #tpu.memory_space<vmem>>, vector<10x24xf32>,
    return
  }
  func.func @transform_0(%arg0: i32) -> (i32, i32) {
    %c0_i32 = arith.constant 0 : i32
    %c0_i32_0 = arith.constant 0 : i32
    return %c0_i32, %arg0 : i32, i32
  }
  func.func @transform_1(%arg0: i32) -> (i32, i32) {
    %c0_i32 = arith.constant 0 : i32
    %c0_i32_0 = arith.constant 0 : i32
    %c0_i32_1 = arith.constant 0 : i32
    return %c0_i32, %c0_i32_0 : i32, i32
  }
  func.func @transform_2(%arg0: i32) -> (i32, i32) {
    %c0_i32 = arith.constant 0 : i32
    %c0_i32_0 = arith.constant 0 : i32
    %c0_i32_1 = arith.constant 0 : i32
    return %c0_i32, %c0_i32_0 : i32, i32
  }
  func.func @transform_3(%arg0: i32) -> (i32, i32) {
    %c0_i32 = arith.constant 0 : i32
    %c0_i32_0 = arith.constant 0 : i32
    %c0_i32_1 = arith.constant 0 : i32
    return %c0_i32, %c0_i32_0 : i32, i32
  }
  func.func @transform_4(%arg0: i32) -> (i32, i32) {
    %c0_i32 = arith.constant 0 : i32
    %c0_i32_0 = arith.constant 0 : i32
    %c0_i32_1 = arith.constant 0 : i32
    return %c0_i32, %c0_i32_0 : i32, i32
  }
  func.func @transform_5(%arg0: i32) -> (i32, i32) {
    %c0_i32 = arith.constant 0 : i32
    %c0_i32_0 = arith.constant 0 : i32
    %c0_i32_1 = arith.constant 0 : i32
    return %c0_i32, %c0_i32_0 : i32, i32
  }
  func.func @transform_6(%arg0: i32) -> (i32, i32) {
    %c0_i32 = arith.constant 0 : i32
    %c0_i32_0 = arith.constant 0 : i32
    %c0_i32_1 = arith.constant 0 : i32
    return %c0_i32, %c0_i32_0 : i32, i32
  }
  func.func @transform_7(%arg0: i32) -> (i32, i32) {
    %c0_i32 = arith.constant 0 : i32
    %c0_i32_0 = arith.constant 0 : i32
    %c0_i32_1 = arith.constant 0 : i32
    return %c0_i32, %c0_i32_0 : i32, i32
  }
  func.func @transform_8(%arg0: i32) -> (i32, i32) {
    %c0_i32 = arith.constant 0 : i32
    %c0_i32_0 = arith.constant 0 : i32
    %c0_i32_1 = arith.constant 0 : i32
    return %c0_i32, %c0_i32_0 : i32, i32
  }
  func.func @transform_9(%arg0: i32) -> (i32, i32) {
    %c0_i32 = arith.constant 0 : i32
    %c0_i32_0 = arith.constant 0 : i32
    return %c0_i32, %arg0 : i32, i32
  }
}

</mosaic_0001>

<llo_original>
// kernel: tpu_custom_call.1
$region0: #{tpu_custom_call.1}
  #allocation0 [shape = 'u32[]', space=smem, size = 0x4, offset = 0x4, fixed_abs, tag = 'smem constant byte address 0x4 - core index']
  #allocation1 [shape = 'u32[72,128]{1,0:T(1,128)}', space=vmem, size = 0x9000, scoped, tag = 'internal scratch']
  %s0 = inlined_call_operand.vmem [shape: f32[608,35], index: 0, kind: input, shape index: {}]
  %s1 = inlined_call_operand.vmem [shape: f32[24,608], index: 1, kind: input, shape index: {}]
  %s2 = inlined_call_operand.vmem [shape: f32[40,48], index: 2, kind: input, shape index: {}]
  %s3 = inlined_call_operand.vmem [shape: f32[56,120], index: 3, kind: input, shape index: {}]
  %s4 = inlined_call_operand.vmem [shape: f32[48,448], index: 4, kind: input, shape index: {}]
  %s5 = inlined_call_operand.vmem [shape: f32[48,1], index: 5, kind: input, shape index: {}]
  %s6 = inlined_call_operand.vmem [shape: f32[64,48], index: 6, kind: input, shape index: {}]
  %s7 = inlined_call_operand.vmem [shape: f32[10,128], index: 7, kind: input, shape index: {}]
  %s8 = inlined_call_operand.vmem [shape: f32[10,1], index: 8, kind: input, shape index: {}]
  %s9 = inlined_call_operand.hbm [shape: f32[10,24], index: 9, kind: output, shape index: {}]
  %s10 = sld [smem:[#allocation0]]
  $region46: #{tpu_custom_call.1} parent=0
    _
  %s12 = ssub.s32 1, %s10
  %s13 = scalar_select 0, %s12, %s10
  $region1: #{tpu_custom_call.1} parent=0
    #allocation2 [shape = 'u8[8192]{0}', space=vmem, size = 0x2000, scoped, tag = 'output window, operand 0, single buffered']
    #allocation3 [shape = 's32[1]{0}', space=sflag, size = 0x4, scoped, tag = 'scoped memory for tpu_custom_call.1']
    %14 = vsyncpa [#allocation3], 0
    // Predicated region
    $region2: #{tpu_custom_call.1} parent=1 // pred_check
      _
    $region3: #{tpu_custom_call.1} parent=1 // pred_check_branch
      %16 = sbr.rel (0) target = $region5
    $region4: #{tpu_custom_call.1} parent=1 // pred_region
      _
    $region5: #{tpu_custom_call.1} parent=1 // pred_fallthru
      _
    // Predicated region
    $region6: #{tpu_custom_call.1} parent=1 // pred_check
      _
    $region7: #{tpu_custom_call.1} parent=1 // pred_check_branch
      %18 = sbr.rel (0) target = $region9
    $region8: #{tpu_custom_call.1} parent=1 // pred_region
      _
    $region9: #{tpu_custom_call.1} parent=1 // pred_fallthru
      _
    // Predicated region
    $region10: #{tpu_custom_call.1} parent=1 // pred_check
      _
    $region11: #{tpu_custom_call.1} parent=1 // pred_check_branch
      %20 = sbr.rel (0) target = $region13
    $region12: #{tpu_custom_call.1} parent=1 // pred_region
      _
    $region13: #{tpu_custom_call.1} parent=1 // pred_fallthru
      _
    // Predicated region
    $region14: #{tpu_custom_call.1} parent=1 // pred_check
      _
    $region15: #{tpu_custom_call.1} parent=1 // pred_check_branch
      %22 = sbr.rel (0) target = $region17
    $region16: #{tpu_custom_call.1} parent=1 // pred_region
      _
    $region17: #{tpu_custom_call.1} parent=1 // pred_fallthru
      _
    // Predicated region
    $region18: #{tpu_custom_call.1} parent=1 // pred_check
      _
    $region19: #{tpu_custom_call.1} parent=1 // pred_check_branch
      %24 = sbr.rel (0) target = $region21
    $region20: #{tpu_custom_call.1} parent=1 // pred_region
      _
    $region21: #{tpu_custom_call.1} parent=1 // pred_fallthru
      _
    // Predicated region
    $region22: #{tpu_custom_call.1} parent=1 // pred_check
      _
    $region23: #{tpu_custom_call.1} parent=1 // pred_check_branch
      %26 = sbr.rel (0) target = $region25
    $region24: #{tpu_custom_call.1} parent=1 // pred_region
      _
    $region25: #{tpu_custom_call.1} parent=1 // pred_fallthru
      _
    // Predicated region
    $region26: #{tpu_custom_call.1} parent=1 // pred_check
      _
    $region27: #{tpu_custom_call.1} parent=1 // pred_check_branch
      %28 = sbr.rel (0) target = $region29
    $region28: #{tpu_custom_call.1} parent=1 // pred_region
      _
    $region29: #{tpu_custom_call.1} parent=1 // pred_fallthru
      _
    // Predicated region
    $region30: #{tpu_custom_call.1} parent=1 // pred_check
      _
    $region31: #{tpu_custom_call.1} parent=1 // pred_check_branch
      %30 = sbr.rel (0) target = $region33
    $region32: #{tpu_custom_call.1} parent=1 // pred_region
      _
    $region33: #{tpu_custom_call.1} parent=1 // pred_fallthru
      _
    // Predicated region
    $region34: #{tpu_custom_call.1} parent=1 // pred_check
      _
    $region35: #{tpu_custom_call.1} parent=1 // pred_check_branch
      %32 = sbr.rel (0) target = $region37
    $region36: #{tpu_custom_call.1} parent=1 // pred_region
      _
    $region37: #{tpu_custom_call.1} parent=1 // pred_fallthru
      _
    %v33 = vld [vmem:[%s0] sm:$0xff]
    %v34 = vld [vmem:[%s0 + $0x8] sm:$0xff]
    %v35 = vld [vmem:[%s0 + $0x10] sm:$0xff]
    %v36 = vld [vmem:[%s0 + $0x18] sm:$0xff]
    %v37 = vld [vmem:[%s0 + $0x20] sm:$0xff]
    %v38 = vld [vmem:[%s0 + $0x28] sm:$0xff]
    %v39 = vld [vmem:[%s0 + $0x30] sm:$0xff]
    %v40 = vld [vmem:[%s0 + $0x38] sm:$0xff]
    %v41 = vld [vmem:[%s0 + $0x40] sm:$0xff]
    %v42 = vld [vmem:[%s0 + $0x48] sm:$0xff]
    %v43 = vld [vmem:[%s0 + $0x50] sm:$0xff]
    %v44 = vld [vmem:[%s0 + $0x58] sm:$0xff]
    %v45 = vld [vmem:[%s0 + $0x60] sm:$0xff]
    %v46 = vld [vmem:[%s0 + $0x68] sm:$0xff]
    %v47 = vld [vmem:[%s0 + $0x70] sm:$0xff]
    %v48 = vld [vmem:[%s0 + $0x78] sm:$0xff]
    %v49 = vld [vmem:[%s0 + $0x80] sm:$0xff]
    %v50 = vld [vmem:[%s0 + $0x88] sm:$0xff]
    %v51 = vld [vmem:[%s0 + $0x90] sm:$0xff]
    %v52 = vld [vmem:[%s0 + $0x98] sm:$0xff]
    %v53 = vld [vmem:[%s0 + $0xa0] sm:$0xff]
    %v54 = vld [vmem:[%s0 + $0xa8] sm:$0xff]
    %v55 = vld [vmem:[%s0 + $0xb0] sm:$0xff]
    %v56 = vld [vmem:[%s0 + $0xb8] sm:$0xff]
    %v57 = vld [vmem:[%s0 + $0xc0] sm:$0xff]
    %v58 = vld [vmem:[%s0 + $0xc8] sm:$0xff]
    %v59 = vld [vmem:[%s0 + $0xd0] sm:$0xff]
    %v60 = vld [vmem:[%s0 + $0xd8] sm:$0xff]
    %v61 = vld [vmem:[%s0 + $0xe0] sm:$0xff]
    %v62 = vld [vmem:[%s0 + $0xe8] sm:$0xff]
    %v63 = vld [vmem:[%s0 + $0xf0] sm:$0xff]
    %v64 = vld [vmem:[%s0 + $0xf8] sm:$0xff]
    %v65 = vld [vmem:[%s0 + $0x100] sm:$0xff]
    %v66 = vld [vmem:[%s0 + $0x108] sm:$0xff]
    %v67 = vld [vmem:[%s0 + $0x110] sm:$0xff]
    %v68 = vld [vmem:[%s0 + $0x118] sm:$0xff]
    %v69 = vld [vmem:[%s0 + $0x120] sm:$0xff]
    %v70 = vld [vmem:[%s0 + $0x128] sm:$0xff]
    %v71 = vld [vmem:[%s0 + $0x130] sm:$0xff]
    %v72 = vld [vmem:[%s0 + $0x138] sm:$0xff]
    %v73 = vld [vmem:[%s0 + $0x140] sm:$0xff]
    %v74 = vld [vmem:[%s0 + $0x148] sm:$0xff]
    %v75 = vld [vmem:[%s0 + $0x150] sm:$0xff]
    %v76 = vld [vmem:[%s0 + $0x158] sm:$0xff]
    %v77 = vld [vmem:[%s0 + $0x160] sm:$0xff]
    %v78 = vld [vmem:[%s0 + $0x168] sm:$0xff]
    %v79 = vld [vmem:[%s0 + $0x170] sm:$0xff]
    %v80 = vld [vmem:[%s0 + $0x178] sm:$0xff]
    %v81 = vld [vmem:[%s0 + $0x180] sm:$0xff]
    %v82 = vld [vmem:[%s0 + $0x188] sm:$0xff]
    %v83 = vld [vmem:[%s0 + $0x190] sm:$0xff]
    %v84 = vld [vmem:[%s0 + $0x198] sm:$0xff]
    %v85 = vld [vmem:[%s0 + $0x1a0] sm:$0xff]
    %v86 = vld [vmem:[%s0 + $0x1a8] sm:$0xff]
    %v87 = vld [vmem:[%s0 + $0x1b0] sm:$0xff]
    %v88 = vld [vmem:[%s0 + $0x1b8] sm:$0xff]
    %v89 = vld [vmem:[%s0 + $0x1c0] sm:$0xff]
    %v90 = vld [vmem:[%s0 + $0x1c8] sm:$0xff]
    %v91 = vld [vmem:[%s0 + $0x1d0] sm:$0xff]
    %v92 = vld [vmem:[%s0 + $0x1d8] sm:$0xff]
    %v93 = vld [vmem:[%s0 + $0x1e0] sm:$0xff]
    %v94 = vld [vmem:[%s0 + $0x1e8] sm:$0xff]
    %v95 = vld [vmem:[%s0 + $0x1f0] sm:$0xff]
    %v96 = vld [vmem:[%s0 + $0x1f8] sm:$0xff]
    %v97 = vld [vmem:[%s0 + $0x200] sm:$0xff]
    %v98 = vld [vmem:[%s0 + $0x208] sm:$0xff]
    %v99 = vld [vmem:[%s0 + $0x210] sm:$0xff]
    %v100 = vld [vmem:[%s0 + $0x218] sm:$0xff]
    %v101 = vld [vmem:[%s0 + $0x220] sm:$0xff]
    %v102 = vld [vmem:[%s0 + $0x228] sm:$0xff]
    %v103 = vld [vmem:[%s0 + $0x230] sm:$0xff]
    %v104 = vld [vmem:[%s0 + $0x238] sm:$0xff]
    %v105 = vld [vmem:[%s0 + $0x240] sm:$0xff]
    %v106 = vld [vmem:[%s0 + $0x248] sm:$0xff]
    %v107 = vld [vmem:[%s0 + $0x250] sm:$0xff]
    %v108 = vld [vmem:[%s0 + $0x258] sm:$0xff]
    %v109 = vld [vmem:[%s1] sm:$0xff]
    %v110 = vld [vmem:[%s1 + $0x8] sm:$0xff]
    %v111 = vld [vmem:[%s1 + $0x10] sm:$0xff]
    %v112 = vld [vmem:[%s1 + $0x18] sm:$0xff]
    %v113 = vld [vmem:[%s1 + $0x20] sm:$0xff]
    %v114 = vld [vmem:[%s1 + $0x28] sm:$0xff]
    %v115 = vld [vmem:[%s1 + $0x30] sm:$0xff]
    %v116 = vld [vmem:[%s1 + $0x38] sm:$0xff]
    %v117 = vld [vmem:[%s1 + $0x40] sm:$0xff]
    %v118 = vld [vmem:[%s1 + $0x48] sm:$0xff]
    %v119 = vld [vmem:[%s1 + $0x50] sm:$0xff]
    %v120 = vld [vmem:[%s1 + $0x58] sm:$0xff]
    %v121 = vld [vmem:[%s1 + $0x60] sm:$0xff]
    %v122 = vld [vmem:[%s1 + $0x68] sm:$0xff]
    %v123 = vld [vmem:[%s1 + $0x70] sm:$0xff]
    %vm124 = vcmask 785408
    %v126 = vsel %vm124, %v113, 0
    %v129 = vsel %vm124, %v118, 0
    %v132 = vsel %vm124, %v123, 0
    %134 = vmatpush.msra.mxu0 %v48
    %135 = vmatpush.msra.mxu0 %v47
    %136 = vmatpush.msra.mxu0 %v46
    %137 = vmatpush.msra.mxu0 %v45
    %138 = vmatpush.msra.mxu0 %v44
    %139 = vmatpush.msra.mxu0 %v43
    %140 = vmatpush.msra.mxu0 %v42
    %141 = vmatpush.msra.mxu0 %v41
    %142 = vmatpush.msra.mxu0 %v40
    %143 = vmatpush.msra.mxu0 %v39
    %144 = vmatpush.msra.mxu0 %v38
    %145 = vmatpush.msra.mxu0 %v37
    %146 = vmatpush.msra.mxu0 %v36
    %147 = vmatpush.msra.mxu0 %v35
    %148 = vmatpush.msra.mxu0 %v34
    %149 = vmatpush.msra.mxu0 %v33
    %150 = vmatmul.f32.gmra.mxu0 %v109
    %v151 = vpop.f32.mrf.mxu0
    %v152 = vadd.f32 0.0, %v151
    %153 = vmatmul.f32.gmra.mxu0 %v114
    %v154 = vpop.f32.mrf.mxu0
    %v155 = vadd.f32 0.0, %v154
    %156 = vmatmul.f32.gmra.mxu0 %v119
    %v157 = vpop.f32.mrf.mxu0
    %v158 = vadd.f32 0.0, %v157
    %159 = vdwg.mxu0
    %160 = vmatpush.msra.mxu0 %v64
    %161 = vmatpush.msra.mxu0 %v63
    %162 = vmatpush.msra.mxu0 %v62
    %163 = vmatpush.msra.mxu0 %v61
    %164 = vmatpush.msra.mxu0 %v60
    %165 = vmatpush.msra.mxu0 %v59
    %166 = vmatpush.msra.mxu0 %v58
    %167 = vmatpush.msra.mxu0 %v57
    %168 = vmatpush.msra.mxu0 %v56
    %169 = vmatpush.msra.mxu0 %v55
    %170 = vmatpush.msra.mxu0 %v54
    %171 = vmatpush.msra.mxu0 %v53
    %172 = vmatpush.msra.mxu0 %v52
    %173 = vmatpush.msra.mxu0 %v51
    %174 = vmatpush.msra.mxu0 %v50
    %175 = vmatpush.msra.mxu0 %v49
    %176 = vmatmul.f32.gmra.mxu0 %v110
    %v177 = vpop.f32.mrf.mxu0
    %v178 = vadd.f32 %v152, %v177
    %179 = vmatmul.f32.gmra.mxu0 %v115
    %v180 = vpop.f32.mrf.mxu0
    %v181 = vadd.f32 %v155, %v180
    %182 = vmatmul.f32.gmra.mxu0 %v120
    %v183 = vpop.f32.mrf.mxu0
    %v184 = vadd.f32 %v158, %v183
    %185 = vdwg.mxu0
    %186 = vmatpush.msra.mxu0 %v80
    %187 = vmatpush.msra.mxu0 %v79
    %188 = vmatpush.msra.mxu0 %v78
    %189 = vmatpush.msra.mxu0 %v77
    %190 = vmatpush.msra.mxu0 %v76
    %191 = vmatpush.msra.mxu0 %v75
    %192 = vmatpush.msra.mxu0 %v74
    %193 = vmatpush.msra.mxu0 %v73
    %194 = vmatpush.msra.mxu0 %v72
    %195 = vmatpush.msra.mxu0 %v71
    %196 = vmatpush.msra.mxu0 %v70
    %197 = vmatpush.msra.mxu0 %v69
    %198 = vmatpush.msra.mxu0 %v68
    %199 = vmatpush.msra.mxu0 %v67
    %200 = vmatpush.msra.mxu0 %v66
    %201 = vmatpush.msra.mxu0 %v65
    %202 = vmatmul.f32.gmra.mxu0 %v111
    %v203 = vpop.f32.mrf.mxu0
    %v204 = vadd.f32 %v178, %v203
    %205 = vmatmul.f32.gmra.mxu0 %v116
    %v206 = vpop.f32.mrf.mxu0
    %v207 = vadd.f32 %v181, %v206
    %208 = vmatmul.f32.gmra.mxu0 %v121
    %v209 = vpop.f32.mrf.mxu0
    %v210 = vadd.f32 %v184, %v209
    %211 = vdwg.mxu0
    %212 = vmatpush.msra.mxu0 %v96
    %213 = vmatpush.msra.mxu0 %v95
    %214 = vmatpush.msra.mxu0 %v94
    %215 = vmatpush.msra.mxu0 %v93
    %216 = vmatpush.msra.mxu0 %v92
    %217 = vmatpush.msra.mxu0 %v91
    %218 = vmatpush.msra.mxu0 %v90
    %219 = vmatpush.msra.mxu0 %v89
    %220 = vmatpush.msra.mxu0 %v88
    %221 = vmatpush.msra.mxu0 %v87
    %222 = vmatpush.msra.mxu0 %v86
    %223 = vmatpush.msra.mxu0 %v85
    %224 = vmatpush.msra.mxu0 %v84
    %225 = vmatpush.msra.mxu0 %v83
    %226 = vmatpush.msra.mxu0 %v82
    %227 = vmatpush.msra.mxu0 %v81
    %228 = vmatmul.f32.gmra.mxu0 %v112
    %v229 = vpop.f32.mrf.mxu0
    %v230 = vadd.f32 %v204, %v229
    %231 = vmatmul.f32.gmra.mxu0 %v117
    %v232 = vpop.f32.mrf.mxu0
    %v233 = vadd.f32 %v207, %v232
    %234 = vmatmul.f32.gmra.mxu0 %v122
    %v235 = vpop.f32.mrf.mxu0
    %v236 = vadd.f32 %v210, %v235
    %237 = vdwg.mxu0
    %238 = vmatpush.msra.mxu0 0.0
    %239 = vmatpush.msra.mxu0 0.0
    %240 = vmatpush.msra.mxu0 0.0
    %241 = vmatpush.msra.mxu0 0.0
    %242 = vmatpush.msra.mxu0 %v108
    %243 = vmatpush.msra.mxu0 %v107
    %244 = vmatpush.msra.mxu0 %v106
    %245 = vmatpush.msra.mxu0 %v105
    %246 = vmatpush.msra.mxu0 %v104
    %247 = vmatpush.msra.mxu0 %v103
    %248 = vmatpush.msra.mxu0 %v102
    %249 = vmatpush.msra.mxu0 %v101
    %250 = vmatpush.msra.mxu0 %v100
    %251 = vmatpush.msra.mxu0 %v99
    %252 = vmatpush.msra.mxu0 %v98
    %253 = vmatpush.msra.mxu0 %v97
    %254 = vmatmul.f32.gmra.mxu0 %v126
    %v255 = vpop.f32.mrf.mxu0
    %v256 = vadd.f32 %v230, %v255
    %257 = vmatmul.f32.gmra.mxu0 %v129
    %v258 = vpop.f32.mrf.mxu0
    %v259 = vadd.f32 %v233, %v258
    %260 = vmatmul.f32.gmra.mxu0 %v132
    %v261 = vpop.f32.mrf.mxu0
    %v262 = vadd.f32 %v236, %v261
    %263 = vdwg.mxu0
    %v264 = vmax.f32 %v256, 0.0
    %v265 = vmax.f32 %v259, 0.0
    %v266 = vmax.f32 %v262, 0.0
    %270 = vrot.lane.b32.xlu0 %v264, 127
    %v271 = vpop.permute.xlu0 %270
    %272 = vrot.lane.b32.xlu0 %v265, 127
    %v273 = vpop.permute.xlu0 %272
    %274 = vrot.lane.b32.xlu0 %v266, 127
    %v275 = vpop.permute.xlu0 %274
    %v279 = vld [vmem:[%s2] sm:$0xff]
    %v280 = vld [vmem:[%s2 + $0x8] sm:$0xff]
    %v281 = vld [vmem:[%s2 + $0x10] sm:$0xff]
    %v282 = vld [vmem:[%s2 + $0x18] sm:$0xff]
    %v283 = vld [vmem:[%s2 + $0x20] sm:$0xff]
    %vm284 = vcmask 392192
    %v286 = vsel %vm284, %v279, 0
    %v289 = vsel %vm284, %v280, 0
    %v292 = vsel %vm284, %v281, 0
    %v295 = vsel %vm284, %v282, 0
    %v298 = vsel %vm284, %v283, 0
    %300 = vmatpush.msra.mxu0 0.0
    %301 = vmatpush.msra.mxu0 0.0
    %302 = vmatpush.msra.mxu0 0.0
    %303 = vmatpush.msra.mxu0 0.0
    %304 = vmatpush.msra.mxu0 0.0
    %305 = vmatpush.msra.mxu0 0.0
    %306 = vmatpush.msra.mxu0 0.0
    %307 = vmatpush.msra.mxu0 0.0
    %308 = vmatpush.msra.mxu0 0.0
    %309 = vmatpush.msra.mxu0 0.0
    %310 = vmatpush.msra.mxu0 %v275
    %311 = vmatpush.msra.mxu0 %v273
    %312 = vmatpush.msra.mxu0 %v271
    %313 = vmatpush.msra.mxu0 %v266
    %314 = vmatpush.msra.mxu0 %v265
    %315 = vmatpush.msra.mxu0 %v264
    %316 = vmatmul.f32.gmra.mxu0 %v286
    %v317 = vpop.f32.mrf.mxu0
    %v318 = vadd.f32 0.0, %v317
    %319 = vmatmul.f32.gmra.mxu0 %v289
    %v320 = vpop.f32.mrf.mxu0
    %v321 = vadd.f32 0.0, %v320
    %322 = vmatmul.f32.gmra.mxu0 %v292
    %v323 = vpop.f32.mrf.mxu0
    %v324 = vadd.f32 0.0, %v323
    %325 = vmatmul.f32.gmra.mxu0 %v295
    %v326 = vpop.f32.mrf.mxu0
    %v327 = vadd.f32 0.0, %v326
    %328 = vmatmul.f32.gmra.mxu0 %v298
    %v329 = vpop.f32.mrf.mxu0
    %v330 = vadd.f32 0.0, %v329
    %331 = vdwg.mxu0
    %337 = vrot.lane.b32.xlu0 %v318, 127
    %v338 = vpop.permute.xlu0 %337
    %339 = vrot.lane.b32.xlu0 %v321, 127
    %v340 = vpop.permute.xlu0 %339
    %341 = vrot.lane.b32.xlu0 %v324, 127
    %v342 = vpop.permute.xlu0 %341
    %343 = vrot.lane.b32.xlu0 %v327, 127
    %v344 = vpop.permute.xlu0 %343
    %345 = vrot.lane.b32.xlu0 %v330, 127
    %v346 = vpop.permute.xlu0 %345
    %352 = vrot.lane.b32.xlu0 %v318, 126
    %v353 = vpop.permute.xlu0 %352
    %354 = vrot.lane.b32.xlu0 %v321, 126
    %v355 = vpop.permute.xlu0 %354
    %356 = vrot.lane.b32.xlu0 %v324, 126
    %v357 = vpop.permute.xlu0 %356
    %358 = vrot.lane.b32.xlu0 %v327, 126
    %v359 = vpop.permute.xlu0 %358
    %360 = vrot.lane.b32.xlu0 %v330, 126
    %v361 = vpop.permute.xlu0 %360
    %v367 = vld [vmem:[%s3] sm:$0xff]
    %v368 = vld [vmem:[%s3 + $0x8] sm:$0xff]
    %v369 = vld [vmem:[%s3 + $0x10] sm:$0xff]
    %v370 = vld [vmem:[%s3 + $0x18] sm:$0xff]
    %v371 = vld [vmem:[%s3 + $0x20] sm:$0xff]
    %v372 = vld [vmem:[%s3 + $0x28] sm:$0xff]
    %v373 = vld [vmem:[%s3 + $0x30] sm:$0xff]
    %vm374 = vcmask 982016
    %v376 = vsel %vm374, %v367, 0
    %v379 = vsel %vm374, %v368, 0
    %v382 = vsel %vm374, %v369, 0
    %v385 = vsel %vm374, %v370, 0
    %v388 = vsel %vm374, %v371, 0
    %v391 = vsel %vm374, %v372, 0
    %v394 = vsel %vm374, %v373, 0
    %396 = vmatpush.msra.mxu0 0.0
    %397 = vmatpush.msra.mxu0 %v361
    %398 = vmatpush.msra.mxu0 %v359
    %399 = vmatpush.msra.mxu0 %v357
    %400 = vmatpush.msra.mxu0 %v355
    %401 = vmatpush.msra.mxu0 %v353
    %402 = vmatpush.msra.mxu0 %v346
    %403 = vmatpush.msra.mxu0 %v344
    %404 = vmatpush.msra.mxu0 %v342
    %405 = vmatpush.msra.mxu0 %v340
    %406 = vmatpush.msra.mxu0 %v338
    %407 = vmatpush.msra.mxu0 %v330
    %408 = vmatpush.msra.mxu0 %v327
    %409 = vmatpush.msra.mxu0 %v324
    %410 = vmatpush.msra.mxu0 %v321
    %411 = vmatpush.msra.mxu0 %v318
    %412 = vmatmul.f32.gmra.mxu0 %v376
    %v413 = vpop.f32.mrf.mxu0
    %v414 = vadd.f32 0.0, %v413
    %415 = vmatmul.f32.gmra.mxu0 %v379
    %v416 = vpop.f32.mrf.mxu0
    %v417 = vadd.f32 0.0, %v416
    %418 = vmatmul.f32.gmra.mxu0 %v382
    %v419 = vpop.f32.mrf.mxu0
    %v420 = vadd.f32 0.0, %v419
    %421 = vmatmul.f32.gmra.mxu0 %v385
    %v422 = vpop.f32.mrf.mxu0
    %v423 = vadd.f32 0.0, %v422
    %424 = vmatmul.f32.gmra.mxu0 %v388
    %v425 = vpop.f32.mrf.mxu0
    %v426 = vadd.f32 0.0, %v425
    %427 = vmatmul.f32.gmra.mxu0 %v391
    %v428 = vpop.f32.mrf.mxu0
    %v429 = vadd.f32 0.0, %v428
    %430 = vmatmul.f32.gmra.mxu0 %v394
    %v431 = vpop.f32.mrf.mxu0
    %v432 = vadd.f32 0.0, %v431
    %433 = vdwg.mxu0
    %v434 = vmax.f32 %v414, 0.0
    %v435 = vmax.f32 %v417, 0.0
    %v436 = vmax.f32 %v420, 0.0
    %v437 = vmax.f32 %v423, 0.0
    %v438 = vmax.f32 %v426, 0.0
    %v439 = vmax.f32 %v429, 0.0
    %v440 = vmax.f32 %v432, 0.0
    %v441 = vld [vmem:[%s5] sm:$0xff]
    %v442 = vld [vmem:[%s5 + $0x8] sm:$0xff]
    %v443 = vld [vmem:[%s5 + $0x10] sm:$0xff]
    %v444 = vld [vmem:[%s5 + $0x18] sm:$0xff]
    %v445 = vld [vmem:[%s5 + $0x20] sm:$0xff]
    %v446 = vld [vmem:[%s5 + $0x28] sm:$0xff]
    %454 = vrot.lane.b32.xlu0 %v434, 127
    %v455 = vpop.permute.xlu0 %454
    %456 = vrot.lane.b32.xlu0 %v435, 127
    %v457 = vpop.permute.xlu0 %456
    %458 = vrot.lane.b32.xlu0 %v436, 127
    %v459 = vpop.permute.xlu0 %458
    %460 = vrot.lane.b32.xlu0 %v437, 127
    %v461 = vpop.permute.xlu0 %460
    %462 = vrot.lane.b32.xlu0 %v438, 127
    %v463 = vpop.permute.xlu0 %462
    %464 = vrot.lane.b32.xlu0 %v439, 127
    %v465 = vpop.permute.xlu0 %464
    %466 = vrot.lane.b32.xlu0 %v440, 127
    %v467 = vpop.permute.xlu0 %466
    %475 = vrot.lane.b32.xlu0 %v434, 126
    %v476 = vpop.permute.xlu0 %475
    %477 = vrot.lane.b32.xlu0 %v435, 126
    %v478 = vpop.permute.xlu0 %477
    %479 = vrot.lane.b32.xlu0 %v436, 126
    %v480 = vpop.permute.xlu0 %479
    %481 = vrot.lane.b32.xlu0 %v437, 126
    %v482 = vpop.permute.xlu0 %481
    %483 = vrot.lane.b32.xlu0 %v438, 126
    %v484 = vpop.permute.xlu0 %483
    %485 = vrot.lane.b32.xlu0 %v439, 126
    %v486 = vpop.permute.xlu0 %485
    %487 = vrot.lane.b32.xlu0 %v440, 126
    %v488 = vpop.permute.xlu0 %487
    %496 = vrot.lane.b32.xlu0 %v434, 125
    %v497 = vpop.permute.xlu0 %496
    %498 = vrot.lane.b32.xlu0 %v435, 125
    %v499 = vpop.permute.xlu0 %498
    %500 = vrot.lane.b32.xlu0 %v436, 125
    %v501 = vpop.permute.xlu0 %500
    %502 = vrot.lane.b32.xlu0 %v437, 125
    %v503 = vpop.permute.xlu0 %502
    %504 = vrot.lane.b32.xlu0 %v438, 125
    %v505 = vpop.permute.xlu0 %504
    %506 = vrot.lane.b32.xlu0 %v439, 125
    %v507 = vpop.permute.xlu0 %506
    %508 = vrot.lane.b32.xlu0 %v440, 125
    %v509 = vpop.permute.xlu0 %508
    %517 = vrot.lane.b32.xlu0 %v434, 124
    %v518 = vpop.permute.xlu0 %517
    %519 = vrot.lane.b32.xlu0 %v435, 124
    %v520 = vpop.permute.xlu0 %519
    %521 = vrot.lane.b32.xlu0 %v436, 124
    %v522 = vpop.permute.xlu0 %521
    %523 = vrot.lane.b32.xlu0 %v437, 124
    %v524 = vpop.permute.xlu0 %523
    %525 = vrot.lane.b32.xlu0 %v438, 124
    %v526 = vpop.permute.xlu0 %525
    %527 = vrot.lane.b32.xlu0 %v439, 124
    %v528 = vpop.permute.xlu0 %527
    %529 = vrot.lane.b32.xlu0 %v440, 124
    %v530 = vpop.permute.xlu0 %529
    %538 = vrot.lane.b32.xlu0 %v434, 123
    %v539 = vpop.permute.xlu0 %538
    %540 = vrot.lane.b32.xlu0 %v435, 123
    %v541 = vpop.permute.xlu0 %540
    %542 = vrot.lane.b32.xlu0 %v436, 123
    %v543 = vpop.permute.xlu0 %542
    %544 = vrot.lane.b32.xlu0 %v437, 123
    %v545 = vpop.permute.xlu0 %544
    %546 = vrot.lane.b32.xlu0 %v438, 123
    %v547 = vpop.permute.xlu0 %546
    %548 = vrot.lane.b32.xlu0 %v439, 123
    %v549 = vpop.permute.xlu0 %548
    %550 = vrot.lane.b32.xlu0 %v440, 123
    %v551 = vpop.permute.xlu0 %550
    %559 = vrot.lane.b32.xlu0 %v434, 122
    %v560 = vpop.permute.xlu0 %559
    %561 = vrot.lane.b32.xlu0 %v435, 122
    %v562 = vpop.permute.xlu0 %561
    %563 = vrot.lane.b32.xlu0 %v436, 122
    %v564 = vpop.permute.xlu0 %563
    %565 = vrot.lane.b32.xlu0 %v437, 122
    %v566 = vpop.permute.xlu0 %565
    %567 = vrot.lane.b32.xlu0 %v438, 122
    %v568 = vpop.permute.xlu0 %567
    %569 = vrot.lane.b32.xlu0 %v439, 122
    %v570 = vpop.permute.xlu0 %569
    %571 = vrot.lane.b32.xlu0 %v440, 122
    %v572 = vpop.permute.xlu0 %571
    %580 = vrot.lane.b32.xlu0 %v434, 121
    %v581 = vpop.permute.xlu0 %580
    %582 = vrot.lane.b32.xlu0 %v435, 121
    %v583 = vpop.permute.xlu0 %582
    %584 = vrot.lane.b32.xlu0 %v436, 121
    %v585 = vpop.permute.xlu0 %584
    %586 = vrot.lane.b32.xlu0 %v437, 121
    %v587 = vpop.permute.xlu0 %586
    %588 = vrot.lane.b32.xlu0 %v438, 121
    %v589 = vpop.permute.xlu0 %588
    %590 = vrot.lane.b32.xlu0 %v439, 121
    %v591 = vpop.permute.xlu0 %590
    %592 = vrot.lane.b32.xlu0 %v440, 121
    %v593 = vpop.permute.xlu0 %592
    %v601 = vld [vmem:[%s4] sm:$0xff]
    %v602 = vld [vmem:[%s4 + $0x8] sm:$0xff]
    %v603 = vld [vmem:[%s4 + $0x10] sm:$0xff]
    %v604 = vld [vmem:[%s4 + $0x18] sm:$0xff]
    %v605 = vld [vmem:[%s4 + $0x20] sm:$0xff]
    %v606 = vld [vmem:[%s4 + $0x28] sm:$0xff]
    %v607 = vld [vmem:[%s4 + $0x30] sm:$0xff]
    %v608 = vld [vmem:[%s4 + $0x38] sm:$0xff]
    %v609 = vld [vmem:[%s4 + $0x40] sm:$0xff]
    %v610 = vld [vmem:[%s4 + $0x48] sm:$0xff]
    %v611 = vld [vmem:[%s4 + $0x50] sm:$0xff]
    %v612 = vld [vmem:[%s4 + $0x58] sm:$0xff]
    %v613 = vld [vmem:[%s4 + $0x60] sm:$0xff]
    %v614 = vld [vmem:[%s4 + $0x68] sm:$0xff]
    %v615 = vld [vmem:[%s4 + $0x70] sm:$0xff]
    %v616 = vld [vmem:[%s4 + $0x78] sm:$0xff]
    %v617 = vld [vmem:[%s4 + $0x80] sm:$0xff]
    %v618 = vld [vmem:[%s4 + $0x88] sm:$0xff]
    %v619 = vld [vmem:[%s4 + $0x90] sm:$0xff]
    %v620 = vld [vmem:[%s4 + $0x98] sm:$0xff]
    %v621 = vld [vmem:[%s4 + $0xa0] sm:$0xff]
    %v622 = vld [vmem:[%s4 + $0xa8] sm:$0xff]
    %v623 = vld [vmem:[%s4 + $0xb0] sm:$0xff]
    %v624 = vld [vmem:[%s4 + $0xb8] sm:$0xff]
    %626 = vset.pattern.permute.xlu0 0
    %627 = vperm.xlu0 %626, %v441
    %v628 = vpop.permute.xlu0 %627
    %631 = vset.pattern.permute.xlu0 0
    %632 = vperm.xlu0 %631, %v442
    %v633 = vpop.permute.xlu0 %632
    %636 = vset.pattern.permute.xlu0 0
    %637 = vperm.xlu0 %636, %v443
    %v638 = vpop.permute.xlu0 %637
    %641 = vset.pattern.permute.xlu0 0
    %642 = vperm.xlu0 %641, %v444
    %v643 = vpop.permute.xlu0 %642
    %646 = vset.pattern.permute.xlu0 0
    %647 = vperm.xlu0 %646, %v445
    %v648 = vpop.permute.xlu0 %647
    %651 = vset.pattern.permute.xlu0 0
    %652 = vperm.xlu0 %651, %v446
    %v653 = vpop.permute.xlu0 %652
    %vm655 = vcmask 523264
    %v657 = vsel %vm655, %v604, 0
    %v660 = vsel %vm655, %v608, 0
    %v663 = vsel %vm655, %v612, 0
    %v666 = vsel %vm655, %v616, 0
    %v669 = vsel %vm655, %v620, 0
    %v672 = vsel %vm655, %v624, 0
    %674 = vmatpush.msra.mxu0 %v478
    %675 = vmatpush.msra.mxu0 %v476
    %676 = vmatpush.msra.mxu0 %v467
    %677 = vmatpush.msra.mxu0 %v465
    %678 = vmatpush.msra.mxu0 %v463
    %679 = vmatpush.msra.mxu0 %v461
    %680 = vmatpush.msra.mxu0 %v459
    %681 = vmatpush.msra.mxu0 %v457
    %682 = vmatpush.msra.mxu0 %v455
    %683 = vmatpush.msra.mxu0 %v440
    %684 = vmatpush.msra.mxu0 %v439
    %685 = vmatpush.msra.mxu0 %v438
    %686 = vmatpush.msra.mxu0 %v437
    %687 = vmatpush.msra.mxu0 %v436
    %688 = vmatpush.msra.mxu0 %v435
    %689 = vmatpush.msra.mxu0 %v434
    %690 = vmatmul.f32.gmra.mxu0 %v601
    %v691 = vpop.f32.mrf.mxu0
    %v692 = vadd.f32 %v628, %v691
    %693 = vmatmul.f32.gmra.mxu0 %v605
    %v694 = vpop.f32.mrf.mxu0
    %v695 = vadd.f32 %v633, %v694
    %696 = vmatmul.f32.gmra.mxu0 %v609
    %v697 = vpop.f32.mrf.mxu0
    %v698 = vadd.f32 %v638, %v697
    %699 = vmatmul.f32.gmra.mxu0 %v613
    %v700 = vpop.f32.mrf.mxu0
    %v701 = vadd.f32 %v643, %v700
    %702 = vmatmul.f32.gmra.mxu0 %v617
    %v703 = vpop.f32.mrf.mxu0
    %v704 = vadd.f32 %v648, %v703
    %705 = vmatmul.f32.gmra.mxu0 %v621
    %v706 = vpop.f32.mrf.mxu0
    %v707 = vadd.f32 %v653, %v706
    %708 = vdwg.mxu0
    %709 = vmatpush.msra.mxu0 %v524
    %710 = vmatpush.msra.mxu0 %v522
    %711 = vmatpush.msra.mxu0 %v520
    %712 = vmatpush.msra.mxu0 %v518
    %713 = vmatpush.msra.mxu0 %v509
    %714 = vmatpush.msra.mxu0 %v507
    %715 = vmatpush.msra.mxu0 %v505
    %716 = vmatpush.msra.mxu0 %v503
    %717 = vmatpush.msra.mxu0 %v501
    %718 = vmatpush.msra.mxu0 %v499
    %719 = vmatpush.msra.mxu0 %v497
    %720 = vmatpush.msra.mxu0 %v488
    %721 = vmatpush.msra.mxu0 %v486
    %722 = vmatpush.msra.mxu0 %v484
    %723 = vmatpush.msra.mxu0 %v482
    %724 = vmatpush.msra.mxu0 %v480
    %725 = vmatmul.f32.gmra.mxu0 %v602
    %v726 = vpop.f32.mrf.mxu0
    %v727 = vadd.f32 %v692, %v726
    %728 = vmatmul.f32.gmra.mxu0 %v606
    %v729 = vpop.f32.mrf.mxu0
    %v730 = vadd.f32 %v695, %v729
    %731 = vmatmul.f32.gmra.mxu0 %v610
    %v732 = vpop.f32.mrf.mxu0
    %v733 = vadd.f32 %v698, %v732
    %734 = vmatmul.f32.gmra.mxu0 %v614
    %v735 = vpop.f32.mrf.mxu0
    %v736 = vadd.f32 %v701, %v735
    %737 = vmatmul.f32.gmra.mxu0 %v618
    %v738 = vpop.f32.mrf.mxu0
    %v739 = vadd.f32 %v704, %v738
    %740 = vmatmul.f32.gmra.mxu0 %v622
    %v741 = vpop.f32.mrf.mxu0
    %v742 = vadd.f32 %v707, %v741
    %743 = vdwg.mxu0
    %744 = vmatpush.msra.mxu0 %v570
    %745 = vmatpush.msra.mxu0 %v568
    %746 = vmatpush.msra.mxu0 %v566
    %747 = vmatpush.msra.mxu0 %v564
    %748 = vmatpush.msra.mxu0 %v562
    %749 = vmatpush.msra.mxu0 %v560
    %750 = vmatpush.msra.mxu0 %v551
    %751 = vmatpush.msra.mxu0 %v549
    %752 = vmatpush.msra.mxu0 %v547
    %753 = vmatpush.msra.mxu0 %v545
    %754 = vmatpush.msra.mxu0 %v543
    %755 = vmatpush.msra.mxu0 %v541
    %756 = vmatpush.msra.mxu0 %v539
    %757 = vmatpush.msra.mxu0 %v530
    %758 = vmatpush.msra.mxu0 %v528
    %759 = vmatpush.msra.mxu0 %v526
    %760 = vmatmul.f32.gmra.mxu0 %v603
    %v761 = vpop.f32.mrf.mxu0
    %v762 = vadd.f32 %v727, %v761
    %763 = vmatmul.f32.gmra.mxu0 %v607
    %v764 = vpop.f32.mrf.mxu0
    %v765 = vadd.f32 %v730, %v764
    %766 = vmatmul.f32.gmra.mxu0 %v611
    %v767 = vpop.f32.mrf.mxu0
    %v768 = vadd.f32 %v733, %v767
    %769 = vmatmul.f32.gmra.mxu0 %v615
    %v770 = vpop.f32.mrf.mxu0
    %v771 = vadd.f32 %v736, %v770
    %772 = vmatmul.f32.gmra.mxu0 %v619
    %v773 = vpop.f32.mrf.mxu0
    %v774 = vadd.f32 %v739, %v773
    %775 = vmatmul.f32.gmra.mxu0 %v623
    %v776 = vpop.f32.mrf.mxu0
    %v777 = vadd.f32 %v742, %v776
    %778 = vdwg.mxu0
    %779 = vmatpush.msra.mxu0 0.0
    %780 = vmatpush.msra.mxu0 0.0
    %781 = vmatpush.msra.mxu0 0.0
    %782 = vmatpush.msra.mxu0 0.0
    %783 = vmatpush.msra.mxu0 0.0
    %784 = vmatpush.msra.mxu0 0.0
    %785 = vmatpush.msra.mxu0 0.0
    %786 = vmatpush.msra.mxu0 0.0
    %787 = vmatpush.msra.mxu0 %v593
    %788 = vmatpush.msra.mxu0 %v591
    %789 = vmatpush.msra.mxu0 %v589
    %790 = vmatpush.msra.mxu0 %v587
    %791 = vmatpush.msra.mxu0 %v585
    %792 = vmatpush.msra.mxu0 %v583
    %793 = vmatpush.msra.mxu0 %v581
    %794 = vmatpush.msra.mxu0 %v572
    %795 = vmatmul.f32.gmra.mxu0 %v657
    %v796 = vpop.f32.mrf.mxu0
    %v797 = vadd.f32 %v762, %v796
    %798 = vmatmul.f32.gmra.mxu0 %v660
    %v799 = vpop.f32.mrf.mxu0
    %v800 = vadd.f32 %v765, %v799
    %801 = vmatmul.f32.gmra.mxu0 %v663
    %v802 = vpop.f32.mrf.mxu0
    %v803 = vadd.f32 %v768, %v802
    %804 = vmatmul.f32.gmra.mxu0 %v666
    %v805 = vpop.f32.mrf.mxu0
    %v806 = vadd.f32 %v771, %v805
    %807 = vmatmul.f32.gmra.mxu0 %v669
    %v808 = vpop.f32.mrf.mxu0
    %v809 = vadd.f32 %v774, %v808
    %810 = vmatmul.f32.gmra.mxu0 %v672
    %v811 = vpop.f32.mrf.mxu0
    %v812 = vadd.f32 %v777, %v811
    %813 = vdwg.mxu0
    %v814 = vmax.f32 %v797, 0.0
    %v815 = vmax.f32 %v800, 0.0
    %v816 = vmax.f32 %v803, 0.0
    %v817 = vmax.f32 %v806, 0.0
    %v818 = vmax.f32 %v809, 0.0
    %v819 = vmax.f32 %v812, 0.0
    %v820 = vld [vmem:[%s6] sm:$0xff]
    %v821 = vld [vmem:[%s6 + $0x8] sm:$0xff]
    %v822 = vld [vmem:[%s6 + $0x10] sm:$0xff]
    %v823 = vld [vmem:[%s6 + $0x18] sm:$0xff]
    %v824 = vld [vmem:[%s6 + $0x20] sm:$0xff]
    %v825 = vld [vmem:[%s6 + $0x28] sm:$0xff]
    %v826 = vld [vmem:[%s6 + $0x30] sm:$0xff]
    %v827 = vld [vmem:[%s6 + $0x38] sm:$0xff]
    %v829 = vsel %vm284, %v820, 0
    %v832 = vsel %vm284, %v821, 0
    %v835 = vsel %vm284, %v822, 0
    %v838 = vsel %vm284, %v823, 0
    %v841 = vsel %vm284, %v824, 0
    %v844 = vsel %vm284, %v825, 0
    %v847 = vsel %vm284, %v826, 0
    %v850 = vsel %vm284, %v827, 0
    %852 = vmatpush.msra.mxu0 0.0
    %853 = vmatpush.msra.mxu0 0.0
    %854 = vmatpush.msra.mxu0 0.0
    %855 = vmatpush.msra.mxu0 0.0
    %856 = vmatpush.msra.mxu0 0.0
    %857 = vmatpush.msra.mxu0 0.0
    %858 = vmatpush.msra.mxu0 0.0
    %859 = vmatpush.msra.mxu0 0.0
    %860 = vmatpush.msra.mxu0 0.0
    %861 = vmatpush.msra.mxu0 0.0
    %862 = vmatpush.msra.mxu0 %v819
    %863 = vmatpush.msra.mxu0 %v818
    %864 = vmatpush.msra.mxu0 %v817
    %865 = vmatpush.msra.mxu0 %v816
    %866 = vmatpush.msra.mxu0 %v815
    %867 = vmatpush.msra.mxu0 %v814
    %868 = vmatmul.f32.gmra.mxu0 %v829
    %v869 = vpop.f32.mrf.mxu0
    %v870 = vadd.f32 0.0, %v869
    %871 = vmatmul.f32.gmra.mxu0 %v832
    %v872 = vpop.f32.mrf.mxu0
    %v873 = vadd.f32 0.0, %v872
    %874 = vmatmul.f32.gmra.mxu0 %v835
    %v875 = vpop.f32.mrf.mxu0
    %v876 = vadd.f32 0.0, %v875
    %877 = vmatmul.f32.gmra.mxu0 %v838
    %v878 = vpop.f32.mrf.mxu0
    %v879 = vadd.f32 0.0, %v878
    %880 = vmatmul.f32.gmra.mxu0 %v841
    %v881 = vpop.f32.mrf.mxu0
    %v882 = vadd.f32 0.0, %v881
    %883 = vmatmul.f32.gmra.mxu0 %v844
    %v884 = vpop.f32.mrf.mxu0
    %v885 = vadd.f32 0.0, %v884
    %886 = vmatmul.f32.gmra.mxu0 %v847
    %v887 = vpop.f32.mrf.mxu0
    %v888 = vadd.f32 0.0, %v887
    %889 = vmatmul.f32.gmra.mxu0 %v850
    %v890 = vpop.f32.mrf.mxu0
    %v891 = vadd.f32 0.0, %v890
    %892 = vdwg.mxu0
    %v893 = vmax.f32 %v870, 0.0
    %v894 = vmax.f32 %v873, 0.0
    %v895 = vmax.f32 %v876, 0.0
    %v896 = vmax.f32 %v879, 0.0
    %v897 = vmax.f32 %v882, 0.0
    %v898 = vmax.f32 %v885, 0.0
    %v899 = vmax.f32 %v888, 0.0
    %v900 = vmax.f32 %v891, 0.0
    %v901 = vld [vmem:[%s8] sm:$0xff]
    %v902 = vld [vmem:[%s8 + $0x8] sm:$0x3]
    %911 = vrot.lane.b32.xlu0 %v893, 127
    %v912 = vpop.permute.xlu0 %911
    %913 = vrot.lane.b32.xlu0 %v894, 127
    %v914 = vpop.permute.xlu0 %913
    %915 = vrot.lane.b32.xlu0 %v895, 127
    %v916 = vpop.permute.xlu0 %915
    %917 = vrot.lane.b32.xlu0 %v896, 127
    %v918 = vpop.permute.xlu0 %917
    %919 = vrot.lane.b32.xlu0 %v897, 127
    %v920 = vpop.permute.xlu0 %919
    %921 = vrot.lane.b32.xlu0 %v898, 127
    %v922 = vpop.permute.xlu0 %921
    %923 = vrot.lane.b32.xlu0 %v899, 127
    %v924 = vpop.permute.xlu0 %923
    %925 = vrot.lane.b32.xlu0 %v900, 127
    %v926 = vpop.permute.xlu0 %925
    %v935 = vld [vmem:[%s7] sm:$0xff]
    %v936 = vld [vmem:[%s7 + $0x8] sm:$0x3]
    %938 = vset.pattern.permute.xlu0 0
    %939 = vperm.xlu0 %938, %v901
    %v940 = vpop.permute.xlu0 %939
    %943 = vset.pattern.permute.xlu0 0
    %944 = vperm.xlu0 %943, %v902
    %v945 = vpop.permute.xlu0 %944
    %947 = vmatpush.msra.mxu0 %v926
    %948 = vmatpush.msra.mxu0 %v924
    %949 = vmatpush.msra.mxu0 %v922
    %950 = vmatpush.msra.mxu0 %v920
    %951 = vmatpush.msra.mxu0 %v918
    %952 = vmatpush.msra.mxu0 %v916
    %953 = vmatpush.msra.mxu0 %v914
    %954 = vmatpush.msra.mxu0 %v912
    %955 = vmatpush.msra.mxu0 %v900
    %956 = vmatpush.msra.mxu0 %v899
    %957 = vmatpush.msra.mxu0 %v898
    %958 = vmatpush.msra.mxu0 %v897
    %959 = vmatpush.msra.mxu0 %v896
    %960 = vmatpush.msra.mxu0 %v895
    %961 = vmatpush.msra.mxu0 %v894
    %962 = vmatpush.msra.mxu0 %v893
    %963 = vmatmul.f32.gmra.mxu0 %v935
    %v964 = vpop.f32.mrf.mxu0
    %v965 = vadd.f32 %v940, %v964
    %966 = vmatmul.f32.gmra.mxu0 %v936
    %v967 = vpop.f32.mrf.mxu0
    %v968 = vadd.f32 %v945, %v967
    %969 = vdwg.mxu0
    %vm970 = vcmask 195584
    %v971 = vsel %vm970, %v965, -inf
    %vm972 = vcmask 189440
    %v973 = vsel %vm972, %v968, -inf
    %v974 = vmax.f32 %v971, %v973
    %v975 = vrot.slane %v974, 4
    %v976 = vmax.f32 %v974, %v975
    %v977 = vrot.slane %v976, 2
    %v978 = vmax.f32 %v976, %v977
    %v979 = vrot.slane %v978, 1
    %v980 = vmax.f32 %v978, %v979
    %v981 = vsub.f32 %v965, %v980
    %v982 = vsub.f32 %v968, %v980
    %v983 = vmul.f32 %v981, 1.442695
    %v984 = vpow.pop %v983
    %v985 = vmul.f32 %v982, 1.442695
    %v986 = vpow.pop %v985
    %v987 = vsel %vm970, %v984, 0.0
    %v988 = vsel %vm972, %v986, 0.0
    %v989 = vadd.f32 %v987, %v988
    %v990 = vrot.slane %v989, 4
    %v991 = vadd.f32 %v989, %v990
    %v992 = vrot.slane %v991, 2
    %v993 = vadd.f32 %v991, %v992
    %v994 = vrot.slane %v993, 1
    %v995 = vadd.f32 %v993, %v994
    %v996 = vlog2.pop %v995
    %v997 = vmul.f32 %v996, 0.6931472
    %v998 = vsub.f32 %v981, %v997
    %v999 = vsub.f32 %v982, %v997
    %1000 = vst.msk [vmem:[#allocation2] sm:$0xff] %vm970, %v998
    %1001 = vst.msk [vmem:[#allocation2 + $0x8] sm:$0x3] %vm972, %v999
    // Predicated region
    $region38: #{tpu_custom_call.1} parent=1 // pred_check
      _
    $region39: #{tpu_custom_call.1} parent=1 // pred_check_branch
      %1003 = sbr.rel (0) target = $region41
    $region40: #{tpu_custom_call.1} parent=1 // pred_region
      %1005 = vsyncadd [#allocation3], 0
      %s1006 = sshll.u32 [#allocation2], 4
      %s1007 = int_to_ptr.vmem [resolvable:$true] %s1006
      %s1008 = sshll.u32 %s9, 4
      %s1009 = int_to_ptr.hbm [resolvable:$true] %s1008
      %1014 = dma.vmem_to_hbm [thread:$0]  %s1007, 256, %s1009, [#allocation3], 128, 128, 8
    $region41: #{tpu_custom_call.1} parent=1 // pred_fallthru
      _
    // Predicated region
    $region42: #{tpu_custom_call.1} parent=1 // pred_check
      _
    $region43: #{tpu_custom_call.1} parent=1 // pred_check_branch
      %1016 = sbr.rel (0) target = $region45
    $region44: #{tpu_custom_call.1} parent=1 // pred_region
      %1018 = dma.done [#allocation3], 256
    $region45: #{tpu_custom_call.1} parent=1 // pred_fallthru
      _
    %1019 = vsyncpa [#allocation3], 1

</llo_original>
